<compile_context>
chip_gen: v7x
topology: tpu7x:2x2x1
jax: 0.10.0
libtpu: 0.0.40
codegen_flags: <defaults>
</compile_context>

<pallas_src>
import jax
import jax.numpy as jnp
from jax.experimental import pallas as pl
from jax.experimental.pallas import tpu as pltpu


def _add_relu_conv1x1_kernel(x1_ref, x2_ref, w_ref, o_ref):
    # x1/x2: (C, M) f32, VMEM-resident (constant index map -> DMA'd once)
    # w:     (tco, C) weight tile (f32 or bf16), streamed over Cout tiles
    # o:     (tco, M) f32 output tile
    a = jnp.maximum(x1_ref[...] + x2_ref[...], 0.0)            # VPU, f32
    w = w_ref[...].astype(jnp.bfloat16)                        # no-op if pre-cast
    o_ref[...] = jnp.dot(                                      # MXU, bf16 in / f32 acc
        w, a.astype(jnp.bfloat16),
        preferred_element_type=jnp.float32,
    ).astype(o_ref.dtype)


def add_relu_conv1x1(x1, x2, weight):
    """x1, x2: (N, C_in, H, W) float32.
    weight: (C_out, C_in, 1, 1) or (C_out, C_in), f32 or (preferably) bf16.

    Returns (N, C_out, H, W), matching PyTorch Conv2d(1x1, stride 1, no bias)
    applied to relu(x1 + x2).
    """
    N, C, H, W = x1.shape
    if weight.ndim == 4:
        weight = weight.reshape(weight.shape[0], weight.shape[1])  # free reshape
    Cout = weight.shape[0]
    M = N * H * W

    if N == 1:
        # (1, C, H, W) -> (C, H*W) is a free reshape (same memory layout).
        xc1 = x1.reshape(C, M)
        xc2 = x2.reshape(C, M)
    else:
        # TODO(synk): for N>1 switch to the (M, C) x (C, Cout) orientation so no
        # real HBM transpose is needed; the module uses N == 1 so this path is cold.
        xc1 = jnp.transpose(x1, (1, 0, 2, 3)).reshape(C, M)
        xc2 = jnp.transpose(x2, (1, 0, 2, 3)).reshape(C, M)

    # Cout tiling: prefer 8/4/2 tiles (weight streaming + megacore parallelism),
    # subject to the 8-sublane divisibility of the tile; otherwise one full block.
    tco = Cout
    for n in (8, 4, 2):
        if Cout % n == 0 and (Cout // n) % 8 == 0:
            tco = Cout // n
            break
    grid = (Cout // tco,)

    # VMEM budget = actual footprint + margin (no arbitrary floor/ceiling):
    #   resident activations (default double-buffered, fetched once),
    #   streamed weight tile (double-buffered), output tile (double-buffered),
    #   in-kernel bf16 temporaries and the f32 dot result.
    wbytes = weight.dtype.itemsize
    vmem_bytes = (
        2 * (2 * C * M * 4)          # x1 + x2 VMEM buffers
        + 2 * (tco * C * wbytes)     # weight tile, double-buffered
        + 2 * (tco * M * 4)          # output tile, double-buffered
        + C * M * 2                  # bf16 activation temporary
        + tco * C * 2                # bf16 weight temporary
        + tco * M * 4                # f32 matmul result before store
    )
    vmem_bytes += 4 << 20            # margin for pipeline bookkeeping / spills

    out = pl.pallas_call(
        _add_relu_conv1x1_kernel,
        out_shape=jax.ShapeDtypeStruct((Cout, M), x1.dtype),
        grid_spec=pltpu.PrefetchScalarGridSpec(
            num_scalar_prefetch=0,
            grid=grid,
            in_specs=[
                pl.BlockSpec((C, M), lambda j: (0, 0)),    # x1, resident (full block)
                pl.BlockSpec((C, M), lambda j: (0, 0)),    # x2, resident (full block)
                pl.BlockSpec((tco, C), lambda j: (j, 0)),  # weight, streamed over Cout
            ],
            out_specs=pl.BlockSpec((tco, M), lambda j: (j, 0)),
        ),
        compiler_params=pltpu.CompilerParams(
            dimension_semantics=("parallel",),
            vmem_limit_bytes=vmem_bytes,
        ),
    )(xc1, xc2, weight)

    if N == 1:
        return out.reshape(1, Cout, H, W)                  # free reshape
    return out.reshape(Cout, N, H, W).transpose(1, 0, 2, 3)


if __name__ == "__main__":
    # Scaled-down shapes consistent with the module (real: 1 x 1344 x 14 x 14):
    # keep the real 14x14 spatial (exercises the non-128-multiple full-M block)
    # and use 336 = 1344/4 channels (multiple of 8, not of 128) -> 2 Cout tiles.
    N, C, H, W = 1, 336, 14, 14
    Cout = 336

    key = jax.random.PRNGKey(0)
    k1, k2, k3 = jax.random.split(key, 3)
    x129 = jax.random.normal(k1, (N, C, H, W), dtype=jnp.float32)
    x137 = jax.random.normal(k2, (N, C, H, W), dtype=jnp.float32)
    # Conv2d(C -> Cout, 1x1, bias=False) weight, PyTorch-like ~1/sqrt(fan_in) scale.
    weight_f32 = jax.random.normal(k3, (Cout, C, 1, 1), dtype=jnp.float32) / jnp.sqrt(C)

    # "Pre-convert once at model load": one-time bf16 cast, outside the call path.
    weight_bf16 = weight_f32.astype(jnp.bfloat16)

    y = jax.block_until_ready(add_relu_conv1x1(x129, x137, weight_bf16))

    # Plain-JAX f32 reference: relu(x1 + x2) then 1x1 conv.
    a = jnp.maximum(x129 + x137, 0.0)
    ref = jnp.einsum("nchw,oc->nohw", a, weight_f32.reshape(Cout, C))
    assert y.shape == (N, Cout, H, W)
    # bf16 MXU operands with f32 accumulation -> slightly looser tolerance.
    max_err = float(jnp.max(jnp.abs(y - ref)))
    assert jnp.allclose(y, ref, atol=5e-2, rtol=5e-2), max_err

    print("KERNEL_OK")
</pallas_src>

<mosaic_0001>
module attributes {stable_mosaic.version = 11 : i64} {
  func.func @_add_relu_conv1x1_kernel(%arg0: i32, %arg1: memref<336x196xf32, #tpu.memory_space<vmem>>, %arg2: memref<336x196xf32, #tpu.memory_space<vmem>>, %arg3: memref<168x336xbf16, #tpu.memory_space<vmem>>, %arg4: memref<168x196xf32, #tpu.memory_space<vmem>>) attributes {dimension_semantics = [#tpu.dimension_semantics<parallel>], iteration_bounds = array<i64: 2>, scalar_prefetch = 0 : i64, scratch_operands = 0 : i64, tpu.core_type = #tpu.core_type<tc>, window_params = [{pipeline_mode = #tpu.pipeline_mode<synchronous>, transform_indices = @transform_0, window_bounds = array<i64: 336, 196>}, {pipeline_mode = #tpu.pipeline_mode<synchronous>, transform_indices = @transform_1, window_bounds = array<i64: 336, 196>}, {transform_indices = @transform_2, window_bounds = array<i64: 168, 336>}, {transform_indices = @transform_3, window_bounds = array<i64: 168, 196>}]} {
    %c0 = arith.constant 0 : index
    %c0_0 = arith.constant 0 : index
    %0 = vector.load %arg1[%c0, %c0_0] : memref<336x196xf32, #tpu.memory_space<vmem>>, vector<336x196xf32>
    %c0_1 = arith.constant 0 : index
    %c0_2 = arith.constant 0 : index
    %1 = vector.load %arg2[%c0_1, %c0_2] : memref<336x196xf32, #tpu.memory_space<vmem>>, vector<336x196xf32>
    %2 = arith.addf %0, %1 : vector<336x196xf32>
    %cst = arith.constant 0.000000e+00 : f32
    %3 = vector.broadcast %cst : f32 to vector<336x196xf32>
    %4 = arith.maximumf %2, %3 : vector<336x196xf32>
    %c0_3 = arith.constant 0 : index
    %c0_4 = arith.constant 0 : index
    %5 = vector.load %arg3[%c0_3, %c0_4] : memref<168x336xbf16, #tpu.memory_space<vmem>>, vector<168x336xbf16>
    %6 = arith.truncf %4 : vector<336x196xf32> to vector<336x196xbf16>
    %cst_5 = arith.constant dense<0.000000e+00> : vector<168x196xf32>
    %7 = tpu.matmul %5, %6, %cst_5 {dimension_numbers = #tpu.dot_dimension_numbers<[1], [0], [0], [1], [0, 0, 1, 1], [], []>} : vector<168x336xbf16>, vector<336x196xbf16>, vector<168x196xf32> -> vector<168x196xf32>
    %c0_6 = arith.constant 0 : index
    %c0_7 = arith.constant 0 : index
    %8 = vector.load %arg4[%c0_6, %c0_7] : memref<168x196xf32, #tpu.memory_space<vmem>>, vector<168x196xf32>
    tpu.vector_store %arg4[%c0_6, %c0_7], %7 {strides = array<i32>} : memref<168x196xf32, #tpu.memory_space<vmem>>, vector<168x196xf32>,
    return
  }
  func.func @transform_0(%arg0: i32) -> (i32, i32) {
    %c0_i32 = arith.constant 0 : i32
    %c0_i32_0 = arith.constant 0 : i32
    %c0_i32_1 = arith.constant 0 : i32
    return %c0_i32, %c0_i32_0 : i32, i32
  }
  func.func @transform_1(%arg0: i32) -> (i32, i32) {
    %c0_i32 = arith.constant 0 : i32
    %c0_i32_0 = arith.constant 0 : i32
    %c0_i32_1 = arith.constant 0 : i32
    return %c0_i32, %c0_i32_0 : i32, i32
  }
  func.func @transform_2(%arg0: i32) -> (i32, i32) {
    %c0_i32 = arith.constant 0 : i32
    %c0_i32_0 = arith.constant 0 : i32
    return %arg0, %c0_i32 : i32, i32
  }
  func.func @transform_3(%arg0: i32) -> (i32, i32) {
    %c0_i32 = arith.constant 0 : i32
    %c0_i32_0 = arith.constant 0 : i32
    return %arg0, %c0_i32 : i32, i32
  }
}

</mosaic_0001>

<llo_original>
// kernel: tpu_custom_call.1
$region0: #{tpu_custom_call.1}
  #allocation0 [shape = 'u32[]', space=smem, size = 0x4, offset = 0x4, fixed_abs, tag = 'smem constant byte address 0x4 - core index']
  #allocation1 [shape = 'u32[144,128]{1,0:T(1,128)}', space=vmem, size = 0x12000, scoped, tag = 'internal scratch']
  %s0 = inlined_call_operand.vmem [shape: f32[336,196], index: 0, kind: input, shape index: {}]
  %s1 = inlined_call_operand.vmem [shape: f32[336,196], index: 1, kind: input, shape index: {}]
  %s2 = inlined_call_operand.vmem [shape: bf16[336,336], index: 2, kind: input, shape index: {}]
  %s3 = inlined_call_operand.vmem [shape: f32[336,196], index: 3, kind: output, shape index: {}]
  %s4 = sld [smem:[#allocation0]]
  $region45: #{tpu_custom_call.1} parent=0
    _
  %s6 = ssub.s32 1, %s4
  %s7 = scalar_select 0, %s6, %s4
  loop: start=0, step=1, limit=4
  $region2: #{tpu_custom_call.1} parent=0 // loop_pre_header
    _
  $region3: #{tpu_custom_call.1} parent=0 // loop_header
    %s9 = sphi 0, %s13
    %p10 = scmp.ge.s32.totalorder %s9, 4
    %s17 = sphi 0, %s17
    %s19 = sphi 0, %s17
    %s20 = sphi 0, %s19
    %s34 = sphi 0, %s20
    %s38 = sphi 0, %s38
    %s40 = sphi 0, %s38
    %s41 = sphi 0, %s40
    %s55 = sphi 0, %s41
    %s61 = sphi 0, %s63
    %s64 = sphi 0, %s61
    %s65 = sphi 0, %s64
    %s81 = sphi 0, %s65
    %s87 = sphi 0, %s89
    %s90 = sphi 0, %s87
    %s91 = sphi 0, %s90
    %s107 = sphi 0, %s91
  $region4: #{tpu_custom_call.1} parent=0 // loop_header_branch
    %12 = sbr.rel (%p10) target = $region8
  $region5: #{tpu_custom_call.1} parent=0 // loop_body
    %s14 = ssub.s32 %s9, 1
    %s15 = ssub.s32 %s9, 2
    %s16 = sadd.s32 %s9, 1
    %s18 = sadd.s32 %s17, 1
    %p21 = scmp.eq.s32.totalorder %s9, 1
    %p22 = scmp.ne.s32.totalorder %s17, %s19
    %p23 = scmp.eq.s32.totalorder %s9, 0
    %p24 = por %p22, %p23
    %p25 = scmp.ne.s32.totalorder %s17, %s19
    %p26 = scmp.eq.s32.totalorder %s14, 1
    %p27 = por %p25, %p26
    %p28 = scmp.ne.s32.totalorder %s19, %s20
    %p29 = scmp.eq.s32.totalorder %s14, 0
    %p30 = por %p28, %p29
    %p31 = scmp.ne.s32.totalorder %s19, %s20
    %p32 = scmp.eq.s32.totalorder %s15, 1
    %p33 = por %p31, %p32
    %p35 = scmp.ne.s32.totalorder %s20, %s34
    %p36 = scmp.eq.s32.totalorder %s15, 0
    %p37 = por %p35, %p36
    %s39 = sadd.s32 %s38, 1
    %p42 = scmp.eq.s32.totalorder %s9, 1
    %p43 = scmp.ne.s32.totalorder %s38, %s40
    %p44 = scmp.eq.s32.totalorder %s9, 0
    %p45 = por %p43, %p44
    %p46 = scmp.ne.s32.totalorder %s38, %s40
    %p47 = scmp.eq.s32.totalorder %s14, 1
    %p48 = por %p46, %p47
    %p49 = scmp.ne.s32.totalorder %s40, %s41
    %p50 = scmp.eq.s32.totalorder %s14, 0
    %p51 = por %p49, %p50
    %p52 = scmp.ne.s32.totalorder %s40, %s41
    %p53 = scmp.eq.s32.totalorder %s15, 1
    %p54 = por %p52, %p53
    %p56 = scmp.ne.s32.totalorder %s41, %s55
    %p57 = scmp.eq.s32.totalorder %s15, 0
    %p58 = por %p56, %p57
    %s59 = ssub.s32 %s9, %s16
    %p60 = scmp.eq.s32.totalorder %s59, 0
    %s62 = sadd.s32 %s61, 1
    %s63 = scalar_select %p60, %s61, %s62
    %p66 = pneg %p60
    %p67 = scmp.eq.s32.totalorder %s9, 1
    %p68 = por %p66, %p67
    %p69 = scmp.ne.s32.totalorder %s61, %s64
    %p70 = scmp.eq.s32.totalorder %s9, 0
    %p71 = por %p69, %p70
    %p72 = scmp.ne.s32.totalorder %s61, %s64
    %p73 = scmp.eq.s32.totalorder %s14, 1
    %p74 = por %p72, %p73
    %p75 = scmp.ne.s32.totalorder %s64, %s65
    %p76 = scmp.eq.s32.totalorder %s14, 0
    %p77 = por %p75, %p76
    %p78 = scmp.ne.s32.totalorder %s64, %s65
    %p79 = scmp.eq.s32.totalorder %s15, 1
    %p80 = por %p78, %p79
    %p82 = scmp.ne.s32.totalorder %s65, %s81
    %p83 = scmp.eq.s32.totalorder %s15, 0
    %p84 = por %p82, %p83
    %s85 = ssub.s32 %s9, %s16
    %p86 = scmp.eq.s32.totalorder %s85, 0
    %s88 = sadd.s32 %s87, 1
    %s89 = scalar_select %p86, %s87, %s88
    %p92 = pneg %p86
    %p93 = scmp.eq.s32.totalorder %s9, 1
    %p94 = por %p92, %p93
    %p95 = scmp.ne.s32.totalorder %s87, %s90
    %p96 = scmp.eq.s32.totalorder %s9, 0
    %p97 = por %p95, %p96
    %p98 = scmp.ne.s32.totalorder %s87, %s90
    %p99 = scmp.eq.s32.totalorder %s14, 1
    %p100 = por %p98, %p99
    %p101 = scmp.ne.s32.totalorder %s90, %s91
    %p102 = scmp.eq.s32.totalorder %s14, 0
    %p103 = por %p101, %p102
    %p104 = scmp.ne.s32.totalorder %s90, %s91
    %p105 = scmp.eq.s32.totalorder %s15, 1
    %p106 = por %p104, %p105
    %p108 = scmp.ne.s32.totalorder %s91, %s107
    %p109 = scmp.eq.s32.totalorder %s15, 0
    %p110 = por %p108, %p109
    %p111 = scmp.le.s32.totalorder 1, %s9
    %p112 = scmp.lt.s32.totalorder %s9, 3
    %p113 = pnand %p111, %p112
    %p114 = pneg %p113
    // Predicated region
    $region9: #{tpu_custom_call.1} parent=5 // pred_check
      _
    $region10: #{tpu_custom_call.1} parent=5 // pred_check_branch
      %116 = sbr.rel (%p113) target = $region12
    $region11: #{tpu_custom_call.1} parent=5 // pred_region
      %s117 = ssub.s32 %s9, 1
      // Predicated region
      $region13: #{tpu_custom_call.1} parent=11 // pred_check
        %p118 = pneg %p30
      $region14: #{tpu_custom_call.1} parent=11 // pred_check_branch
        %120 = sbr.rel (%p118) target = $region16
      $region15: #{tpu_custom_call.1} parent=11 // pred_region
        _
      $region16: #{tpu_custom_call.1} parent=11 // pred_fallthru
        _
      // Predicated region
      $region17: #{tpu_custom_call.1} parent=11 // pred_check
        %p121 = pneg %p51
      $region18: #{tpu_custom_call.1} parent=11 // pred_check_branch
        %123 = sbr.rel (%p121) target = $region20
      $region19: #{tpu_custom_call.1} parent=11 // pred_region
        _
      $region20: #{tpu_custom_call.1} parent=11 // pred_fallthru
        _
    $region12: #{tpu_custom_call.1} parent=5 // pred_fallthru
      _
    %p124 = scmp.lt.s32.totalorder %s9, 2
    // Predicated region
    $region21: #{tpu_custom_call.1} parent=5 // pred_check
      %p125 = pneg %p124
    $region22: #{tpu_custom_call.1} parent=5 // pred_check_branch
      %127 = sbr.rel (%p125) target = $region24
    $region23: #{tpu_custom_call.1} parent=5 // pred_region
      // Predicated region
      $region25: #{tpu_custom_call.1} parent=23 // pred_check
        %p128 = pneg %p71
      $region26: #{tpu_custom_call.1} parent=23 // pred_check_branch
        %130 = sbr.rel (%p128) target = $region28
      $region27: #{tpu_custom_call.1} parent=23 // pred_region
        %s131 = smul.u32 21, %s9
        %p132 = scmp.lt.s32.totalorder %s131, 41
        %s133 = scalar_select %p132, %s131, 41
        %s134 = smul.addr %s133, 3
        %s135 = smul.addr %s134, 4
        %s136 = scalar_lea.vmem %s2, %s135
        %s137 = smul.u32 21, %s9
      $region28: #{tpu_custom_call.1} parent=23 // pred_fallthru
        _
    $region24: #{tpu_custom_call.1} parent=5 // pred_fallthru
      _
    %p138 = scmp.le.s32.totalorder 1, %s9
    %p139 = scmp.lt.s32.totalorder %s9, 3
    %p140 = pnand %p138, %p139
    %p141 = pneg %p140
    // Predicated region
    $region29: #{tpu_custom_call.1} parent=5 // pred_check
      _
    $region30: #{tpu_custom_call.1} parent=5 // pred_check_branch
      %143 = sbr.rel (%p140) target = $region32
    $region31: #{tpu_custom_call.1} parent=5 // pred_region
      %s144 = ssub.s32 %s9, 1
      %p145 = pneg %p30
      %p146 = pneg %p27
      %p147 = pneg %p51
      %p148 = pneg %p48
      %s149 = smul.u32 21, %s14
      %p150 = scmp.lt.s32.totalorder %s149, 41
      %s151 = scalar_select %p150, %s149, 41
      %s152 = smul.addr %s151, 3
      %s153 = smul.addr %s152, 4
      %s154 = scalar_lea.vmem %s2, %s153
      %p155 = pneg %p77
      %p156 = pneg %p74
      %p157 = pneg %p103
      %p158 = pneg %p100
      %s159 = smul.u32 21, %s14
      %p160 = scmp.lt.s32.totalorder %s159, 41
      %s161 = scalar_select %p160, %s159, 41
      %s162 = smul.addr %s161, 2
      %s163 = smul.addr %s162, 8
      %s164 = scalar_lea.vmem %s3, %s163
      %s165 = smul.u32 21, %s14
      %p166 = scmp.lt.s32.totalorder %s165, 41
      %s167 = scalar_select %p166, %s165, 41
      %s168 = smul.addr %s167, 3
      %s169 = smul.addr %s168, 4
      %s170 = scalar_lea.vmem %s2, %s169
      %s171 = smul.u32 21, %s14
      %s172 = smul.u32 21, %s14
      %p173 = scmp.lt.s32.totalorder %s172, 41
      %s174 = scalar_select %p173, %s172, 41
      %s175 = smul.addr %s174, 2
      %s176 = smul.addr %s175, 8
      %s177 = scalar_lea.vmem %s3, %s176
      %s178 = smul.u32 21, %s14
      %v180 = vld [vmem:[%s0] sm:$0xff]
      %v181 = vld [vmem:[%s0 + $0x8] sm:$0xff]
      %v182 = vld [vmem:[%s0 + $0x10] sm:$0xff]
      %v183 = vld [vmem:[%s0 + $0x18] sm:$0xff]
      %v184 = vld [vmem:[%s0 + $0x20] sm:$0xff]
      %v185 = vld [vmem:[%s0 + $0x28] sm:$0xff]
      %v186 = vld [vmem:[%s0 + $0x30] sm:$0xff]
      %v187 = vld [vmem:[%s0 + $0x38] sm:$0xff]
      %v188 = vld [vmem:[%s0 + $0x40] sm:$0xff]
      %v189 = vld [vmem:[%s0 + $0x48] sm:$0xff]
      %v190 = vld [vmem:[%s0 + $0x50] sm:$0xff]
      %v191 = vld [vmem:[%s0 + $0x58] sm:$0xff]
      %v192 = vld [vmem:[%s0 + $0x60] sm:$0xff]
      %v193 = vld [vmem:[%s0 + $0x68] sm:$0xff]
      %v194 = vld [vmem:[%s0 + $0x70] sm:$0xff]
      %v195 = vld [vmem:[%s0 + $0x78] sm:$0xff]
      %v196 = vld [vmem:[%s0 + $0x80] sm:$0xff]
      %v197 = vld [vmem:[%s0 + $0x88] sm:$0xff]
      %v198 = vld [vmem:[%s0 + $0x90] sm:$0xff]
      %v199 = vld [vmem:[%s0 + $0x98] sm:$0xff]
      %v200 = vld [vmem:[%s0 + $0xa0] sm:$0xff]
      %v201 = vld [vmem:[%s0 + $0xa8] sm:$0xff]
      %v202 = vld [vmem:[%s0 + $0xb0] sm:$0xff]
      %v203 = vld [vmem:[%s0 + $0xb8] sm:$0xff]
      %v204 = vld [vmem:[%s0 + $0xc0] sm:$0xff]
      %v205 = vld [vmem:[%s0 + $0xc8] sm:$0xff]
      %v206 = vld [vmem:[%s0 + $0xd0] sm:$0xff]
      %v207 = vld [vmem:[%s0 + $0xd8] sm:$0xff]
      %v208 = vld [vmem:[%s0 + $0xe0] sm:$0xff]
      %v209 = vld [vmem:[%s0 + $0xe8] sm:$0xff]
      %v210 = vld [vmem:[%s0 + $0xf0] sm:$0xff]
      %v211 = vld [vmem:[%s0 + $0xf8] sm:$0xff]
      %v212 = vld [vmem:[%s0 + $0x100] sm:$0xff]
      %v213 = vld [vmem:[%s0 + $0x108] sm:$0xff]
      %v214 = vld [vmem:[%s0 + $0x110] sm:$0xff]
      %v215 = vld [vmem:[%s0 + $0x118] sm:$0xff]
      %v216 = vld [vmem:[%s0 + $0x120] sm:$0xff]
      %v217 = vld [vmem:[%s0 + $0x128] sm:$0xff]
      %v218 = vld [vmem:[%s0 + $0x130] sm:$0xff]
      %v219 = vld [vmem:[%s0 + $0x138] sm:$0xff]
      %v220 = vld [vmem:[%s0 + $0x140] sm:$0xff]
      %v221 = vld [vmem:[%s0 + $0x148] sm:$0xff]
      %v222 = vld [vmem:[%s0 + $0x150] sm:$0xff]
      %v223 = vld [vmem:[%s0 + $0x158] sm:$0xff]
      %v224 = vld [vmem:[%s0 + $0x160] sm:$0xff]
      %v225 = vld [vmem:[%s0 + $0x168] sm:$0xff]
      %v226 = vld [vmem:[%s0 + $0x170] sm:$0xff]
      %v227 = vld [vmem:[%s0 + $0x178] sm:$0xff]
      %v228 = vld [vmem:[%s0 + $0x180] sm:$0xff]
      %v229 = vld [vmem:[%s0 + $0x188] sm:$0xff]
      %v230 = vld [vmem:[%s0 + $0x190] sm:$0xff]
      %v231 = vld [vmem:[%s0 + $0x198] sm:$0xff]
      %v232 = vld [vmem:[%s0 + $0x1a0] sm:$0xff]
      %v233 = vld [vmem:[%s0 + $0x1a8] sm:$0xff]
      %v234 = vld [vmem:[%s0 + $0x1b0] sm:$0xff]
      %v235 = vld [vmem:[%s0 + $0x1b8] sm:$0xff]
      %v236 = vld [vmem:[%s0 + $0x1c0] sm:$0xff]
      %v237 = vld [vmem:[%s0 + $0x1c8] sm:$0xff]
      %v238 = vld [vmem:[%s0 + $0x1d0] sm:$0xff]
      %v239 = vld [vmem:[%s0 + $0x1d8] sm:$0xff]
      %v240 = vld [vmem:[%s0 + $0x1e0] sm:$0xff]
      %v241 = vld [vmem:[%s0 + $0x1e8] sm:$0xff]
      %v242 = vld [vmem:[%s0 + $0x1f0] sm:$0xff]
      %v243 = vld [vmem:[%s0 + $0x1f8] sm:$0xff]
      %v244 = vld [vmem:[%s0 + $0x200] sm:$0xff]
      %v245 = vld [vmem:[%s0 + $0x208] sm:$0xff]
      %v246 = vld [vmem:[%s0 + $0x210] sm:$0xff]
      %v247 = vld [vmem:[%s0 + $0x218] sm:$0xff]
      %v248 = vld [vmem:[%s0 + $0x220] sm:$0xff]
      %v249 = vld [vmem:[%s0 + $0x228] sm:$0xff]
      %v250 = vld [vmem:[%s0 + $0x230] sm:$0xff]
      %v251 = vld [vmem:[%s0 + $0x238] sm:$0xff]
      %v252 = vld [vmem:[%s0 + $0x240] sm:$0xff]
      %v253 = vld [vmem:[%s0 + $0x248] sm:$0xff]
      %v254 = vld [vmem:[%s0 + $0x250] sm:$0xff]
      %v255 = vld [vmem:[%s0 + $0x258] sm:$0xff]
      %v256 = vld [vmem:[%s0 + $0x260] sm:$0xff]
      %v257 = vld [vmem:[%s0 + $0x268] sm:$0xff]
      %v258 = vld [vmem:[%s0 + $0x270] sm:$0xff]
      %v259 = vld [vmem:[%s0 + $0x278] sm:$0xff]
      %v260 = vld [vmem:[%s0 + $0x280] sm:$0xff]
      %v261 = vld [vmem:[%s0 + $0x288] sm:$0xff]
      %v262 = vld [vmem:[%s0 + $0x290] sm:$0xff]
      %v263 = vld [vmem:[%s0 + $0x298] sm:$0xff]
      %v264 = vld [vmem:[%s1] sm:$0xff]
      %v265 = vld [vmem:[%s1 + $0x8] sm:$0xff]
      %v266 = vld [vmem:[%s1 + $0x10] sm:$0xff]
      %v267 = vld [vmem:[%s1 + $0x18] sm:$0xff]
      %v268 = vld [vmem:[%s1 + $0x20] sm:$0xff]
      %v269 = vld [vmem:[%s1 + $0x28] sm:$0xff]
      %v270 = vld [vmem:[%s1 + $0x30] sm:$0xff]
      %v271 = vld [vmem:[%s1 + $0x38] sm:$0xff]
      %v272 = vld [vmem:[%s1 + $0x40] sm:$0xff]
      %v273 = vld [vmem:[%s1 + $0x48] sm:$0xff]
      %v274 = vld [vmem:[%s1 + $0x50] sm:$0xff]
      %v275 = vld [vmem:[%s1 + $0x58] sm:$0xff]
      %v276 = vld [vmem:[%s1 + $0x60] sm:$0xff]
      %v277 = vld [vmem:[%s1 + $0x68] sm:$0xff]
      %v278 = vld [vmem:[%s1 + $0x70] sm:$0xff]
      %v279 = vld [vmem:[%s1 + $0x78] sm:$0xff]
      %v280 = vld [vmem:[%s1 + $0x80] sm:$0xff]
      %v281 = vld [vmem:[%s1 + $0x88] sm:$0xff]
      %v282 = vld [vmem:[%s1 + $0x90] sm:$0xff]
      %v283 = vld [vmem:[%s1 + $0x98] sm:$0xff]
      %v284 = vld [vmem:[%s1 + $0xa0] sm:$0xff]
      %v285 = vld [vmem:[%s1 + $0xa8] sm:$0xff]
      %v286 = vld [vmem:[%s1 + $0xb0] sm:$0xff]
      %v287 = vld [vmem:[%s1 + $0xb8] sm:$0xff]
      %v288 = vld [vmem:[%s1 + $0xc0] sm:$0xff]
      %v289 = vld [vmem:[%s1 + $0xc8] sm:$0xff]
      %v290 = vld [vmem:[%s1 + $0xd0] sm:$0xff]
      %v291 = vld [vmem:[%s1 + $0xd8] sm:$0xff]
      %v292 = vld [vmem:[%s1 + $0xe0] sm:$0xff]
      %v293 = vld [vmem:[%s1 + $0xe8] sm:$0xff]
      %v294 = vld [vmem:[%s1 + $0xf0] sm:$0xff]
      %v295 = vld [vmem:[%s1 + $0xf8] sm:$0xff]
      %v296 = vld [vmem:[%s1 + $0x100] sm:$0xff]
      %v297 = vld [vmem:[%s1 + $0x108] sm:$0xff]
      %v298 = vld [vmem:[%s1 + $0x110] sm:$0xff]
      %v299 = vld [vmem:[%s1 + $0x118] sm:$0xff]
      %v300 = vld [vmem:[%s1 + $0x120] sm:$0xff]
      %v301 = vld [vmem:[%s1 + $0x128] sm:$0xff]
      %v302 = vld [vmem:[%s1 + $0x130] sm:$0xff]
      %v303 = vld [vmem:[%s1 + $0x138] sm:$0xff]
      %v304 = vld [vmem:[%s1 + $0x140] sm:$0xff]
      %v305 = vld [vmem:[%s1 + $0x148] sm:$0xff]
      %v306 = vld [vmem:[%s1 + $0x150] sm:$0xff]
      %v307 = vld [vmem:[%s1 + $0x158] sm:$0xff]
      %v308 = vld [vmem:[%s1 + $0x160] sm:$0xff]
      %v309 = vld [vmem:[%s1 + $0x168] sm:$0xff]
      %v310 = vld [vmem:[%s1 + $0x170] sm:$0xff]
      %v311 = vld [vmem:[%s1 + $0x178] sm:$0xff]
      %v312 = vld [vmem:[%s1 + $0x180] sm:$0xff]
      %v313 = vld [vmem:[%s1 + $0x188] sm:$0xff]
      %v314 = vld [vmem:[%s1 + $0x190] sm:$0xff]
      %v315 = vld [vmem:[%s1 + $0x198] sm:$0xff]
      %v316 = vld [vmem:[%s1 + $0x1a0] sm:$0xff]
      %v317 = vld [vmem:[%s1 + $0x1a8] sm:$0xff]
      %v318 = vld [vmem:[%s1 + $0x1b0] sm:$0xff]
      %v319 = vld [vmem:[%s1 + $0x1b8] sm:$0xff]
      %v320 = vld [vmem:[%s1 + $0x1c0] sm:$0xff]
      %v321 = vld [vmem:[%s1 + $0x1c8] sm:$0xff]
      %v322 = vld [vmem:[%s1 + $0x1d0] sm:$0xff]
      %v323 = vld [vmem:[%s1 + $0x1d8] sm:$0xff]
      %v324 = vld [vmem:[%s1 + $0x1e0] sm:$0xff]
      %v325 = vld [vmem:[%s1 + $0x1e8] sm:$0xff]
      %v326 = vld [vmem:[%s1 + $0x1f0] sm:$0xff]
      %v327 = vld [vmem:[%s1 + $0x1f8] sm:$0xff]
      %v328 = vld [vmem:[%s1 + $0x200] sm:$0xff]
      %v329 = vld [vmem:[%s1 + $0x208] sm:$0xff]
      %v330 = vld [vmem:[%s1 + $0x210] sm:$0xff]
      %v331 = vld [vmem:[%s1 + $0x218] sm:$0xff]
      %v332 = vld [vmem:[%s1 + $0x220] sm:$0xff]
      %v333 = vld [vmem:[%s1 + $0x228] sm:$0xff]
      %v334 = vld [vmem:[%s1 + $0x230] sm:$0xff]
      %v335 = vld [vmem:[%s1 + $0x238] sm:$0xff]
      %v336 = vld [vmem:[%s1 + $0x240] sm:$0xff]
      %v337 = vld [vmem:[%s1 + $0x248] sm:$0xff]
      %v338 = vld [vmem:[%s1 + $0x250] sm:$0xff]
      %v339 = vld [vmem:[%s1 + $0x258] sm:$0xff]
      %v340 = vld [vmem:[%s1 + $0x260] sm:$0xff]
      %v341 = vld [vmem:[%s1 + $0x268] sm:$0xff]
      %v342 = vld [vmem:[%s1 + $0x270] sm:$0xff]
      %v343 = vld [vmem:[%s1 + $0x278] sm:$0xff]
      %v344 = vld [vmem:[%s1 + $0x280] sm:$0xff]
      %v345 = vld [vmem:[%s1 + $0x288] sm:$0xff]
      %v346 = vld [vmem:[%s1 + $0x290] sm:$0xff]
      %v347 = vld [vmem:[%s1 + $0x298] sm:$0xff]
      %v348 = vadd.f32 %v180, %v264
      %v349 = vadd.f32 %v181, %v265
      %v350 = vadd.f32 %v182, %v266
      %v351 = vadd.f32 %v183, %v267
      %v352 = vadd.f32 %v184, %v268
      %v353 = vadd.f32 %v185, %v269
      %v354 = vadd.f32 %v186, %v270
      %v355 = vadd.f32 %v187, %v271
      %v356 = vadd.f32 %v188, %v272
      %v357 = vadd.f32 %v189, %v273
      %v358 = vadd.f32 %v190, %v274
      %v359 = vadd.f32 %v191, %v275
      %v360 = vadd.f32 %v192, %v276
      %v361 = vadd.f32 %v193, %v277
      %v362 = vadd.f32 %v194, %v278
      %v363 = vadd.f32 %v195, %v279
      %v364 = vadd.f32 %v196, %v280
      %v365 = vadd.f32 %v197, %v281
      %v366 = vadd.f32 %v198, %v282
      %v367 = vadd.f32 %v199, %v283
      %v368 = vadd.f32 %v200, %v284
      %v369 = vadd.f32 %v201, %v285
      %v370 = vadd.f32 %v202, %v286
      %v371 = vadd.f32 %v203, %v287
      %v372 = vadd.f32 %v204, %v288
      %v373 = vadd.f32 %v205, %v289
      %v374 = vadd.f32 %v206, %v290
      %v375 = vadd.f32 %v207, %v291
      %v376 = vadd.f32 %v208, %v292
      %v377 = vadd.f32 %v209, %v293
      %v378 = vadd.f32 %v210, %v294
      %v379 = vadd.f32 %v211, %v295
      %v380 = vadd.f32 %v212, %v296
      %v381 = vadd.f32 %v213, %v297
      %v382 = vadd.f32 %v214, %v298
      %v383 = vadd.f32 %v215, %v299
      %v384 = vadd.f32 %v216, %v300
      %v385 = vadd.f32 %v217, %v301
      %v386 = vadd.f32 %v218, %v302
      %v387 = vadd.f32 %v219, %v303
      %v388 = vadd.f32 %v220, %v304
      %v389 = vadd.f32 %v221, %v305
      %v390 = vadd.f32 %v222, %v306
      %v391 = vadd.f32 %v223, %v307
      %v392 = vadd.f32 %v224, %v308
      %v393 = vadd.f32 %v225, %v309
      %v394 = vadd.f32 %v226, %v310
      %v395 = vadd.f32 %v227, %v311
      %v396 = vadd.f32 %v228, %v312
      %v397 = vadd.f32 %v229, %v313
      %v398 = vadd.f32 %v230, %v314
      %v399 = vadd.f32 %v231, %v315
      %v400 = vadd.f32 %v232, %v316
      %v401 = vadd.f32 %v233, %v317
      %v402 = vadd.f32 %v234, %v318
      %v403 = vadd.f32 %v235, %v319
      %v404 = vadd.f32 %v236, %v320
      %v405 = vadd.f32 %v237, %v321
      %v406 = vadd.f32 %v238, %v322
      %v407 = vadd.f32 %v239, %v323
      %v408 = vadd.f32 %v240, %v324
      %v409 = vadd.f32 %v241, %v325
      %v410 = vadd.f32 %v242, %v326
      %v411 = vadd.f32 %v243, %v327
      %v412 = vadd.f32 %v244, %v328
      %v413 = vadd.f32 %v245, %v329
      %v414 = vadd.f32 %v246, %v330
      %v415 = vadd.f32 %v247, %v331
      %v416 = vadd.f32 %v248, %v332
      %v417 = vadd.f32 %v249, %v333
      %v418 = vadd.f32 %v250, %v334
      %v419 = vadd.f32 %v251, %v335
      %v420 = vadd.f32 %v252, %v336
      %v421 = vadd.f32 %v253, %v337
      %v422 = vadd.f32 %v254, %v338
      %v423 = vadd.f32 %v255, %v339
      %v424 = vadd.f32 %v256, %v340
      %v425 = vadd.f32 %v257, %v341
      %v426 = vadd.f32 %v258, %v342
      %v427 = vadd.f32 %v259, %v343
      %v428 = vadd.f32 %v260, %v344
      %v429 = vadd.f32 %v261, %v345
      %v430 = vadd.f32 %v262, %v346
      %v431 = vadd.f32 %v263, %v347
      %v432 = vmax.f32 %v348, 0.0
      %v433 = vmax.f32 %v349, 0.0
      %v434 = vmax.f32 %v350, 0.0
      %v435 = vmax.f32 %v351, 0.0
      %v436 = vmax.f32 %v352, 0.0
      %v437 = vmax.f32 %v353, 0.0
      %v438 = vmax.f32 %v354, 0.0
      %v439 = vmax.f32 %v355, 0.0
      %v440 = vmax.f32 %v356, 0.0
      %v441 = vmax.f32 %v357, 0.0
      %v442 = vmax.f32 %v358, 0.0
      %v443 = vmax.f32 %v359, 0.0
      %v444 = vmax.f32 %v360, 0.0
      %v445 = vmax.f32 %v361, 0.0
      %v446 = vmax.f32 %v362, 0.0
      %v447 = vmax.f32 %v363, 0.0
      %v448 = vmax.f32 %v364, 0.0
      %v449 = vmax.f32 %v365, 0.0
      %v450 = vmax.f32 %v366, 0.0
      %v451 = vmax.f32 %v367, 0.0
      %v452 = vmax.f32 %v368, 0.0
      %v453 = vmax.f32 %v369, 0.0
      %v454 = vmax.f32 %v370, 0.0
      %v455 = vmax.f32 %v371, 0.0
      %v456 = vmax.f32 %v372, 0.0
      %v457 = vmax.f32 %v373, 0.0
      %v458 = vmax.f32 %v374, 0.0
      %v459 = vmax.f32 %v375, 0.0
      %v460 = vmax.f32 %v376, 0.0
      %v461 = vmax.f32 %v377, 0.0
      %v462 = vmax.f32 %v378, 0.0
      %v463 = vmax.f32 %v379, 0.0
      %v464 = vmax.f32 %v380, 0.0
      %v465 = vmax.f32 %v381, 0.0
      %v466 = vmax.f32 %v382, 0.0
      %v467 = vmax.f32 %v383, 0.0
      %v468 = vmax.f32 %v384, 0.0
      %v469 = vmax.f32 %v385, 0.0
      %v470 = vmax.f32 %v386, 0.0
      %v471 = vmax.f32 %v387, 0.0
      %v472 = vmax.f32 %v388, 0.0
      %v473 = vmax.f32 %v389, 0.0
      %v474 = vmax.f32 %v390, 0.0
      %v475 = vmax.f32 %v391, 0.0
      %v476 = vmax.f32 %v392, 0.0
      %v477 = vmax.f32 %v393, 0.0
      %v478 = vmax.f32 %v394, 0.0
      %v479 = vmax.f32 %v395, 0.0
      %v480 = vmax.f32 %v396, 0.0
      %v481 = vmax.f32 %v397, 0.0
      %v482 = vmax.f32 %v398, 0.0
      %v483 = vmax.f32 %v399, 0.0
      %v484 = vmax.f32 %v400, 0.0
      %v485 = vmax.f32 %v401, 0.0
      %v486 = vmax.f32 %v402, 0.0
      %v487 = vmax.f32 %v403, 0.0
      %v488 = vmax.f32 %v404, 0.0
      %v489 = vmax.f32 %v405, 0.0
      %v490 = vmax.f32 %v406, 0.0
      %v491 = vmax.f32 %v407, 0.0
      %v492 = vmax.f32 %v408, 0.0
      %v493 = vmax.f32 %v409, 0.0
      %v494 = vmax.f32 %v410, 0.0
      %v495 = vmax.f32 %v411, 0.0
      %v496 = vmax.f32 %v412, 0.0
      %v497 = vmax.f32 %v413, 0.0
      %v498 = vmax.f32 %v414, 0.0
      %v499 = vmax.f32 %v415, 0.0
      %v500 = vmax.f32 %v416, 0.0
      %v501 = vmax.f32 %v417, 0.0
      %v502 = vmax.f32 %v418, 0.0
      %v503 = vmax.f32 %v419, 0.0
      %v504 = vmax.f32 %v420, 0.0
      %v505 = vmax.f32 %v421, 0.0
      %v506 = vmax.f32 %v422, 0.0
      %v507 = vmax.f32 %v423, 0.0
      %v508 = vmax.f32 %v424, 0.0
      %v509 = vmax.f32 %v425, 0.0
      %v510 = vmax.f32 %v426, 0.0
      %v511 = vmax.f32 %v427, 0.0
      %v512 = vmax.f32 %v428, 0.0
      %v513 = vmax.f32 %v429, 0.0
      %v514 = vmax.f32 %v430, 0.0
      %v515 = vmax.f32 %v431, 0.0
      %v516 = vld [vmem:[%s170] sm:$0xff]
      %v517 = vld [vmem:[%s170 + $0x8] sm:$0xf]
      %v518 = vld [vmem:[%s170 + $0xc] sm:$0xff]
      %v519 = vld [vmem:[%s170 + $0x14] sm:$0xf]
      %v520 = vld [vmem:[%s170 + $0x18] sm:$0xff]
      %v521 = vld [vmem:[%s170 + $0x20] sm:$0xf]
      %v522 = vld [vmem:[%s170 + $0x24] sm:$0xff]
      %v523 = vld [vmem:[%s170 + $0x2c] sm:$0xf]
      %v524 = vld [vmem:[%s170 + $0x30] sm:$0xff]
      %v525 = vld [vmem:[%s170 + $0x38] sm:$0xf]
      %v526 = vld [vmem:[%s170 + $0x3c] sm:$0xff]
      %v527 = vld [vmem:[%s170 + $0x44] sm:$0xf]
      %v528 = vld [vmem:[%s170 + $0x48] sm:$0xff]
      %v529 = vld [vmem:[%s170 + $0x50] sm:$0xf]
      %v530 = vld [vmem:[%s170 + $0x54] sm:$0xff]
      %v531 = vld [vmem:[%s170 + $0x5c] sm:$0xf]
      %v532 = vld [vmem:[%s170 + $0x60] sm:$0xff]
      %v533 = vld [vmem:[%s170 + $0x68] sm:$0xf]
      %v534 = vld [vmem:[%s170 + $0x6c] sm:$0xff]
      %v535 = vld [vmem:[%s170 + $0x74] sm:$0xf]
      %v536 = vld [vmem:[%s170 + $0x78] sm:$0xff]
      %v537 = vld [vmem:[%s170 + $0x80] sm:$0xf]
      %v538 = vld [vmem:[%s170 + $0x84] sm:$0xff]
      %v539 = vld [vmem:[%s170 + $0x8c] sm:$0xf]
      %v540 = vld [vmem:[%s170 + $0x90] sm:$0xff]
      %v541 = vld [vmem:[%s170 + $0x98] sm:$0xf]
      %v542 = vld [vmem:[%s170 + $0x9c] sm:$0xff]
      %v543 = vld [vmem:[%s170 + $0xa4] sm:$0xf]
      %v544 = vld [vmem:[%s170 + $0xa8] sm:$0xff]
      %v545 = vld [vmem:[%s170 + $0xb0] sm:$0xf]
      %v546 = vld [vmem:[%s170 + $0xb4] sm:$0xff]
      %v547 = vld [vmem:[%s170 + $0xbc] sm:$0xf]
      %v548 = vld [vmem:[%s170 + $0xc0] sm:$0xff]
      %v549 = vld [vmem:[%s170 + $0xc8] sm:$0xf]
      %v550 = vld [vmem:[%s170 + $0xcc] sm:$0xff]
      %v551 = vld [vmem:[%s170 + $0xd4] sm:$0xf]
      %v552 = vld [vmem:[%s170 + $0xd8] sm:$0xff]
      %v553 = vld [vmem:[%s170 + $0xe0] sm:$0xf]
      %v554 = vld [vmem:[%s170 + $0xe4] sm:$0xff]
      %v555 = vld [vmem:[%s170 + $0xec] sm:$0xf]
      %v556 = vld [vmem:[%s170 + $0xf0] sm:$0xff]
      %v557 = vld [vmem:[%s170 + $0xf8] sm:$0xf]
      %v558 = vpack.c.bf16 %v434, %v432
      %v559 = vpack.c.bf16 %v435, %v433
      %v560 = vpack.c.bf16 %v438, %v436
      %v561 = vpack.c.bf16 %v439, %v437
      %v562 = vpack.c.bf16 %v442, %v440
      %v563 = vpack.c.bf16 %v443, %v441
      %v564 = vpack.c.bf16 %v446, %v444
      %v565 = vpack.c.bf16 %v447, %v445
      %v566 = vpack.c.bf16 %v450, %v448
      %v567 = vpack.c.bf16 %v451, %v449
      %v568 = vpack.c.bf16 %v454, %v452
      %v569 = vpack.c.bf16 %v455, %v453
      %v570 = vpack.c.bf16 %v458, %v456
      %v571 = vpack.c.bf16 %v459, %v457
      %v572 = vpack.c.bf16 %v462, %v460
      %v573 = vpack.c.bf16 %v463, %v461
      %v574 = vpack.c.bf16 %v466, %v464
      %v575 = vpack.c.bf16 %v467, %v465
      %v576 = vpack.c.bf16 %v470, %v468
      %v577 = vpack.c.bf16 %v471, %v469
      %v578 = vpack.c.bf16 %v474, %v472
      %v579 = vpack.c.bf16 %v475, %v473
      %v580 = vpack.c.bf16 %v478, %v476
      %v581 = vpack.c.bf16 %v479, %v477
      %v582 = vpack.c.bf16 %v482, %v480
      %v583 = vpack.c.bf16 %v483, %v481
      %v584 = vpack.c.bf16 %v486, %v484
      %v585 = vpack.c.bf16 %v487, %v485
      %v586 = vpack.c.bf16 %v490, %v488
      %v587 = vpack.c.bf16 %v491, %v489
      %v588 = vpack.c.bf16 %v494, %v492
      %v589 = vpack.c.bf16 %v495, %v493
      %v590 = vpack.c.bf16 %v498, %v496
      %v591 = vpack.c.bf16 %v499, %v497
      %v592 = vpack.c.bf16 %v502, %v500
      %v593 = vpack.c.bf16 %v503, %v501
      %v594 = vpack.c.bf16 %v506, %v504
      %v595 = vpack.c.bf16 %v507, %v505
      %v596 = vpack.c.bf16 %v510, %v508
      %v597 = vpack.c.bf16 %v511, %v509
      %v598 = vpack.c.bf16 %v514, %v512
      %v599 = vpack.c.bf16 %v515, %v513
      %v642 = vunpack.c.l.b16 %v516
      %v643 = vunpack.c.h.b16 %v516
      %v644 = vunpack.c.l.b16 %v517
      %v645 = vunpack.c.l.b16 %v518
      %v646 = vunpack.c.h.b16 %v518
      %v647 = vunpack.c.l.b16 %v519
      %v648 = vunpack.c.l.b16 %v520
      %v649 = vunpack.c.h.b16 %v520
      %v650 = vunpack.c.l.b16 %v521
      %v651 = vunpack.c.l.b16 %v522
      %v652 = vunpack.c.h.b16 %v522
      %v653 = vunpack.c.l.b16 %v523
      %v654 = vunpack.c.l.b16 %v524
      %v655 = vunpack.c.h.b16 %v524
      %v656 = vunpack.c.l.b16 %v525
      %v657 = vunpack.c.l.b16 %v526
      %v658 = vunpack.c.h.b16 %v526
      %v659 = vunpack.c.l.b16 %v527
      %v660 = vunpack.c.l.b16 %v528
      %v661 = vunpack.c.h.b16 %v528
      %v662 = vunpack.c.l.b16 %v529
      %v663 = vunpack.c.l.b16 %v530
      %v664 = vunpack.c.h.b16 %v530
      %v665 = vunpack.c.l.b16 %v531
      %v666 = vunpack.c.l.b16 %v532
      %v667 = vunpack.c.h.b16 %v532
      %v668 = vunpack.c.l.b16 %v533
      %v669 = vunpack.c.l.b16 %v534
      %v670 = vunpack.c.h.b16 %v534
      %v671 = vunpack.c.l.b16 %v535
      %v672 = vunpack.c.l.b16 %v536
      %v673 = vunpack.c.h.b16 %v536
      %v674 = vunpack.c.l.b16 %v537
      %v675 = vunpack.c.l.b16 %v538
      %v676 = vunpack.c.h.b16 %v538
      %v677 = vunpack.c.l.b16 %v539
      %v678 = vunpack.c.l.b16 %v540
      %v679 = vunpack.c.h.b16 %v540
      %v680 = vunpack.c.l.b16 %v541
      %v681 = vunpack.c.l.b16 %v542
      %v682 = vunpack.c.h.b16 %v542
      %v683 = vunpack.c.l.b16 %v543
      %v684 = vunpack.c.l.b16 %v544
      %v685 = vunpack.c.h.b16 %v544
      %v686 = vunpack.c.l.b16 %v545
      %v687 = vunpack.c.l.b16 %v546
      %v688 = vunpack.c.h.b16 %v546
      %v689 = vunpack.c.l.b16 %v547
      %v690 = vunpack.c.l.b16 %v548
      %v691 = vunpack.c.h.b16 %v548
      %v692 = vunpack.c.l.b16 %v549
      %v693 = vunpack.c.l.b16 %v550
      %v694 = vunpack.c.h.b16 %v550
      %v695 = vunpack.c.l.b16 %v551
      %v696 = vunpack.c.l.b16 %v552
      %v697 = vunpack.c.h.b16 %v552
      %v698 = vunpack.c.l.b16 %v553
      %v699 = vunpack.c.l.b16 %v554
      %v700 = vunpack.c.h.b16 %v554
      %v701 = vunpack.c.l.b16 %v555
      %v702 = vunpack.c.l.b16 %v556
      %v703 = vunpack.c.h.b16 %v556
      %v704 = vunpack.c.l.b16 %v557
      %v705 = vpack.c.b16 %v645, %v642
      %v706 = vpack.c.b16 %v646, %v643
      %v707 = vpack.c.b16 %v647, %v644
      %v708 = vpack.c.b16 %v651, %v648
      %v709 = vpack.c.b16 %v652, %v649
      %v710 = vpack.c.b16 %v653, %v650
      %v711 = vpack.c.b16 %v657, %v654
      %v712 = vpack.c.b16 %v658, %v655
      %v713 = vpack.c.b16 %v659, %v656
      %v714 = vpack.c.b16 %v663, %v660
      %v715 = vpack.c.b16 %v664, %v661
      %v716 = vpack.c.b16 %v665, %v662
      %v717 = vpack.c.b16 %v669, %v666
      %v718 = vpack.c.b16 %v670, %v667
      %v719 = vpack.c.b16 %v671, %v668
      %v720 = vpack.c.b16 %v675, %v672
      %v721 = vpack.c.b16 %v676, %v673
      %v722 = vpack.c.b16 %v677, %v674
      %v723 = vpack.c.b16 %v681, %v678
      %v724 = vpack.c.b16 %v682, %v679
      %v725 = vpack.c.b16 %v683, %v680
      %v726 = vpack.c.b16 %v687, %v684
      %v727 = vpack.c.b16 %v688, %v685
      %v728 = vpack.c.b16 %v689, %v686
      %v729 = vpack.c.b16 %v693, %v690
      %v730 = vpack.c.b16 %v694, %v691
      %v731 = vpack.c.b16 %v695, %v692
      %v732 = vpack.c.b16 %v699, %v696
      %v733 = vpack.c.b16 %v700, %v697
      %v734 = vpack.c.b16 %v701, %v698
      %v735 = vpack.c.b16 %v702, %v702
      %v736 = vpack.c.b16 %v703, %v703
      %v737 = vpack.c.b16 %v704, %v704
      %vm760 = vcmask 654336
      %v762 = vsel %vm760, %v707, 0
      %v765 = vsel %vm760, %v710, 0
      %v768 = vsel %vm760, %v713, 0
      %v771 = vsel %vm760, %v716, 0
      %v774 = vsel %vm760, %v719, 0
      %v777 = vsel %vm760, %v722, 0
      %v780 = vsel %vm760, %v725, 0
      %v783 = vsel %vm760, %v728, 0
      %v786 = vsel %vm760, %v731, 0
      %v789 = vsel %vm760, %v734, 0
      %v792 = vsel %vm760, %v737, 0
      %794 = vmatprep.subr.bf16.mxu0 %v559
      %795 = vmatpush1.bf16.msra.mxu0 %v558
      %796 = vmatprep.subr.bf16.mxu0 %v561
      %797 = vmatpush1.bf16.msra.mxu0 %v560
      %798 = vmatprep.subr.bf16.mxu0 %v563
      %799 = vmatpush1.bf16.msra.mxu0 %v562
      %800 = vmatprep.subr.bf16.mxu0 %v565
      %801 = vmatpush1.bf16.msra.mxu0 %v564
      %802 = vmatprep.subr.bf16.mxu0 %v567
      %803 = vmatpush1.bf16.msra.mxu0 %v566
      %804 = vmatprep.subr.bf16.mxu0 %v569
      %805 = vmatpush1.bf16.msra.mxu0 %v568
      %806 = vmatprep.subr.bf16.mxu0 %v571
      %807 = vmatpush1.bf16.msra.mxu0 %v570
      %808 = vmatprep.subr.bf16.mxu0 %v573
      %809 = vmatpush1.bf16.msra.mxu0 %v572
      %810 = vmatprep.subr.bf16.mxu0 %v575
      %811 = vmatpush1.bf16.msra.mxu0 %v574
      %812 = vmatprep.subr.bf16.mxu0 %v577
      %813 = vmatpush1.bf16.msra.mxu0 %v576
      %814 = vmatprep.subr.bf16.mxu0 %v579
      %815 = vmatpush1.bf16.msra.mxu0 %v578
      %816 = vmatprep.subr.bf16.mxu0 %v581
      %817 = vmatpush1.bf16.msra.mxu0 %v580
      %818 = vmatprep.subr.bf16.mxu0 %v583
      %819 = vmatpush1.bf16.msra.mxu0 %v582
      %820 = vmatprep.subr.bf16.mxu0 %v585
      %821 = vmatpush1.bf16.msra.mxu0 %v584
      %822 = vmatprep.subr.bf16.mxu0 %v587
      %823 = vmatpush1.bf16.msra.mxu0 %v586
      %824 = vmatprep.subr.bf16.mxu0 %v589
      %825 = vmatpush1.bf16.msra.mxu0 %v588
      %826 = vmatprep.mubr.bf16.mxu0 %v706
      %827 = vmatmul.mubr.bf16.gmra.mrb[0].mxu0 %v705
      %v828 = vpop.f32.mrb[0].mxu0
      %v829 = vadd.f32 0.0, %v828
      %v830 = vpop.f32.mrb[0].mxu0
      %v831 = vadd.f32 0.0, %v830
      %v832 = vpop.f32.mrb[0].mxu0
      %v833 = vadd.f32 0.0, %v832
      %v834 = vpop.f32.mrb[0].mxu0
      %v835 = vadd.f32 0.0, %v834
      %836 = vmatprep.mubr.bf16.mxu0 %v709
      %837 = vmatmul.mubr.bf16.gmra.mrb[0].mxu0 %v708
      %v838 = vpop.f32.mrb[0].mxu0
      %v839 = vadd.f32 0.0, %v838
      %v840 = vpop.f32.mrb[0].mxu0
      %v841 = vadd.f32 0.0, %v840
      %v842 = vpop.f32.mrb[0].mxu0
      %v843 = vadd.f32 0.0, %v842
      %v844 = vpop.f32.mrb[0].mxu0
      %v845 = vadd.f32 0.0, %v844
      %846 = vmatprep.mubr.bf16.mxu0 %v712
      %847 = vmatmul.mubr.bf16.gmra.mrb[0].mxu0 %v711
      %v848 = vpop.f32.mrb[0].mxu0
      %v849 = vadd.f32 0.0, %v848
      %v850 = vpop.f32.mrb[0].mxu0
      %v851 = vadd.f32 0.0, %v850
      %v852 = vpop.f32.mrb[0].mxu0
      %v853 = vadd.f32 0.0, %v852
      %v854 = vpop.f32.mrb[0].mxu0
      %v855 = vadd.f32 0.0, %v854
      %856 = vmatprep.mubr.bf16.mxu0 %v715
      %857 = vmatmul.mubr.bf16.gmra.mrb[0].mxu0 %v714
      %v858 = vpop.f32.mrb[0].mxu0
      %v859 = vadd.f32 0.0, %v858
      %v860 = vpop.f32.mrb[0].mxu0
      %v861 = vadd.f32 0.0, %v860
      %v862 = vpop.f32.mrb[0].mxu0
      %v863 = vadd.f32 0.0, %v862
      %v864 = vpop.f32.mrb[0].mxu0
      %v865 = vadd.f32 0.0, %v864
      %866 = vmatprep.mubr.bf16.mxu0 %v718
      %867 = vmatmul.mubr.bf16.gmra.mrb[0].mxu0 %v717
      %v868 = vpop.f32.mrb[0].mxu0
      %v869 = vadd.f32 0.0, %v868
      %v870 = vpop.f32.mrb[0].mxu0
      %v871 = vadd.f32 0.0, %v870
      %v872 = vpop.f32.mrb[0].mxu0
      %v873 = vadd.f32 0.0, %v872
      %v874 = vpop.f32.mrb[0].mxu0
      %v875 = vadd.f32 0.0, %v874
      %876 = vmatprep.mubr.bf16.mxu0 %v721
      %877 = vmatmul.mubr.bf16.gmra.mrb[0].mxu0 %v720
      %v878 = vpop.f32.mrb[0].mxu0
      %v879 = vadd.f32 0.0, %v878
      %v880 = vpop.f32.mrb[0].mxu0
      %v881 = vadd.f32 0.0, %v880
      %v882 = vpop.f32.mrb[0].mxu0
      %v883 = vadd.f32 0.0, %v882
      %v884 = vpop.f32.mrb[0].mxu0
      %v885 = vadd.f32 0.0, %v884
      %886 = vmatprep.mubr.bf16.mxu0 %v724
      %887 = vmatmul.mubr.bf16.gmra.mrb[0].mxu0 %v723
      %v888 = vpop.f32.mrb[0].mxu0
      %v889 = vadd.f32 0.0, %v888
      %v890 = vpop.f32.mrb[0].mxu0
      %v891 = vadd.f32 0.0, %v890
      %v892 = vpop.f32.mrb[0].mxu0
      %v893 = vadd.f32 0.0, %v892
      %v894 = vpop.f32.mrb[0].mxu0
      %v895 = vadd.f32 0.0, %v894
      %896 = vmatprep.mubr.bf16.mxu0 %v727
      %897 = vmatmul.mubr.bf16.gmra.mrb[0].mxu0 %v726
      %v898 = vpop.f32.mrb[0].mxu0
      %v899 = vadd.f32 0.0, %v898
      %v900 = vpop.f32.mrb[0].mxu0
      %v901 = vadd.f32 0.0, %v900
      %v902 = vpop.f32.mrb[0].mxu0
      %v903 = vadd.f32 0.0, %v902
      %v904 = vpop.f32.mrb[0].mxu0
      %v905 = vadd.f32 0.0, %v904
      %906 = vmatprep.mubr.bf16.mxu0 %v730
      %907 = vmatmul.mubr.bf16.gmra.mrb[0].mxu0 %v729
      %v908 = vpop.f32.mrb[0].mxu0
      %v909 = vadd.f32 0.0, %v908
      %v910 = vpop.f32.mrb[0].mxu0
      %v911 = vadd.f32 0.0, %v910
      %v912 = vpop.f32.mrb[0].mxu0
      %v913 = vadd.f32 0.0, %v912
      %v914 = vpop.f32.mrb[0].mxu0
      %v915 = vadd.f32 0.0, %v914
      %916 = vmatprep.mubr.bf16.mxu0 %v733
      %917 = vmatmul.mubr.bf16.gmra.mrb[0].mxu0 %v732
      %v918 = vpop.f32.mrb[0].mxu0
      %v919 = vadd.f32 0.0, %v918
      %v920 = vpop.f32.mrb[0].mxu0
      %v921 = vadd.f32 0.0, %v920
      %v922 = vpop.f32.mrb[0].mxu0
      %v923 = vadd.f32 0.0, %v922
      %v924 = vpop.f32.mrb[0].mxu0
      %v925 = vadd.f32 0.0, %v924
      %926 = vmatprep.mubr.bf16.mxu0 %v736
      %927 = vmatmul.mubr.bf16.gmra.mrb[0].mxu0 %v735
      %v928 = vpop.f32.mrb[0].mxu0
      %v929 = vadd.f32 0.0, %v928
      %v930 = vpop.f32.mrb[0].mxu0
      %v931 = vadd.f32 0.0, %v930
      %v932 = vpop.f32.mrb[0].mxu0
      %v933 = vpop.f32.mrb[0].mxu0
      %934 = vdwg.mxu0
      %935 = vmatprep.subr.bf16.mxu0 %v591
      %936 = vmatpush1.bf16.msra.mxu0 %v590
      %937 = vmatprep.subr.bf16.mxu0 %v593
      %938 = vmatpush1.bf16.msra.mxu0 %v592
      %939 = vmatprep.subr.bf16.mxu0 %v595
      %940 = vmatpush1.bf16.msra.mxu0 %v594
      %941 = vmatprep.subr.bf16.mxu0 %v597
      %942 = vmatpush1.bf16.msra.mxu0 %v596
      %943 = vmatprep.subr.bf16.mxu0 %v599
      %944 = vmatpush1.bf16.msra.mxu0 %v598
      %945 = vmatprep.subr.bf16.mxu0 0
      %946 = vmatpush1.bf16.msra.mxu0 0
      %947 = vmatprep.subr.bf16.mxu0 0
      %948 = vmatpush1.bf16.msra.mxu0 0
      %949 = vmatprep.subr.bf16.mxu0 0
      %950 = vmatpush1.bf16.msra.mxu0 0
      %951 = vmatprep.subr.bf16.mxu0 0
      %952 = vmatpush1.bf16.msra.mxu0 0
      %953 = vmatprep.subr.bf16.mxu0 0
      %954 = vmatpush1.bf16.msra.mxu0 0
      %955 = vmatprep.subr.bf16.mxu0 0
      %956 = vmatpush1.bf16.msra.mxu0 0
      %957 = vmatprep.subr.bf16.mxu0 0
      %958 = vmatpush1.bf16.msra.mxu0 0
      %959 = vmatprep.subr.bf16.mxu0 0
      %960 = vmatpush1.bf16.msra.mxu0 0
      %961 = vmatprep.subr.bf16.mxu0 0
      %962 = vmatpush1.bf16.msra.mxu0 0
      %963 = vmatprep.subr.bf16.mxu0 0
      %964 = vmatpush1.bf16.msra.mxu0 0
      %965 = vmatprep.subr.bf16.mxu0 0
      %966 = vmatpush1.bf16.msra.mxu0 0
      %967 = vmatprep.mubr.bf16.mxu0 0
      %968 = vmatmul.mubr.bf16.gmra.mrb[0].mxu0 %v762
      %v969 = vpop.f32.mrb[0].mxu0
      %v970 = vadd.f32 %v829, %v969
      %v971 = vpop.f32.mrb[0].mxu0
      %v972 = vadd.f32 %v831, %v971
      %v973 = vpop.f32.mrb[0].mxu0
      %v974 = vadd.f32 %v833, %v973
      %v975 = vpop.f32.mrb[0].mxu0
      %v976 = vadd.f32 %v835, %v975
      %977 = vmatprep.mubr.bf16.mxu0 0
      %978 = vmatmul.mubr.bf16.gmra.mrb[0].mxu0 %v765
      %v979 = vpop.f32.mrb[0].mxu0
      %v980 = vadd.f32 %v839, %v979
      %v981 = vpop.f32.mrb[0].mxu0
      %v982 = vadd.f32 %v841, %v981
      %v983 = vpop.f32.mrb[0].mxu0
      %v984 = vadd.f32 %v843, %v983
      %v985 = vpop.f32.mrb[0].mxu0
      %v986 = vadd.f32 %v845, %v985
      %987 = vmatprep.mubr.bf16.mxu0 0
      %988 = vmatmul.mubr.bf16.gmra.mrb[0].mxu0 %v768
      %v989 = vpop.f32.mrb[0].mxu0
      %v990 = vadd.f32 %v849, %v989
      %v991 = vpop.f32.mrb[0].mxu0
      %v992 = vadd.f32 %v851, %v991
      %v993 = vpop.f32.mrb[0].mxu0
      %v994 = vadd.f32 %v853, %v993
      %v995 = vpop.f32.mrb[0].mxu0
      %v996 = vadd.f32 %v855, %v995
      %997 = vmatprep.mubr.bf16.mxu0 0
      %998 = vmatmul.mubr.bf16.gmra.mrb[0].mxu0 %v771
      %v999 = vpop.f32.mrb[0].mxu0
      %v1000 = vadd.f32 %v859, %v999
      %v1001 = vpop.f32.mrb[0].mxu0
      %v1002 = vadd.f32 %v861, %v1001
      %v1003 = vpop.f32.mrb[0].mxu0
      %v1004 = vadd.f32 %v863, %v1003
      %v1005 = vpop.f32.mrb[0].mxu0
      %v1006 = vadd.f32 %v865, %v1005
      %1007 = vmatprep.mubr.bf16.mxu0 0
      %1008 = vmatmul.mubr.bf16.gmra.mrb[0].mxu0 %v774
      %v1009 = vpop.f32.mrb[0].mxu0
      %v1010 = vadd.f32 %v869, %v1009
      %v1011 = vpop.f32.mrb[0].mxu0
      %v1012 = vadd.f32 %v871, %v1011
      %v1013 = vpop.f32.mrb[0].mxu0
      %v1014 = vadd.f32 %v873, %v1013
      %v1015 = vpop.f32.mrb[0].mxu0
      %v1016 = vadd.f32 %v875, %v1015
      %1017 = vmatprep.mubr.bf16.mxu0 0
      %1018 = vmatmul.mubr.bf16.gmra.mrb[0].mxu0 %v777
      %v1019 = vpop.f32.mrb[0].mxu0
      %v1020 = vadd.f32 %v879, %v1019
      %v1021 = vpop.f32.mrb[0].mxu0
      %v1022 = vadd.f32 %v881, %v1021
      %v1023 = vpop.f32.mrb[0].mxu0
      %v1024 = vadd.f32 %v883, %v1023
      %v1025 = vpop.f32.mrb[0].mxu0
      %v1026 = vadd.f32 %v885, %v1025
      %1027 = vmatprep.mubr.bf16.mxu0 0
      %1028 = vmatmul.mubr.bf16.gmra.mrb[0].mxu0 %v780
      %v1029 = vpop.f32.mrb[0].mxu0
      %v1030 = vadd.f32 %v889, %v1029
      %v1031 = vpop.f32.mrb[0].mxu0
      %v1032 = vadd.f32 %v891, %v1031
      %v1033 = vpop.f32.mrb[0].mxu0
      %v1034 = vadd.f32 %v893, %v1033
      %v1035 = vpop.f32.mrb[0].mxu0
      %v1036 = vadd.f32 %v895, %v1035
      %1037 = vmatprep.mubr.bf16.mxu0 0
      %1038 = vmatmul.mubr.bf16.gmra.mrb[0].mxu0 %v783
      %v1039 = vpop.f32.mrb[0].mxu0
      %v1040 = vadd.f32 %v899, %v1039
      %v1041 = vpop.f32.mrb[0].mxu0
      %v1042 = vadd.f32 %v901, %v1041
      %v1043 = vpop.f32.mrb[0].mxu0
      %v1044 = vadd.f32 %v903, %v1043
      %v1045 = vpop.f32.mrb[0].mxu0
      %v1046 = vadd.f32 %v905, %v1045
      %1047 = vmatprep.mubr.bf16.mxu0 0
      %1048 = vmatmul.mubr.bf16.gmra.mrb[0].mxu0 %v786
      %v1049 = vpop.f32.mrb[0].mxu0
      %v1050 = vadd.f32 %v909, %v1049
      %v1051 = vpop.f32.mrb[0].mxu0
      %v1052 = vadd.f32 %v911, %v1051
      %v1053 = vpop.f32.mrb[0].mxu0
      %v1054 = vadd.f32 %v913, %v1053
      %v1055 = vpop.f32.mrb[0].mxu0
      %v1056 = vadd.f32 %v915, %v1055
      %1057 = vmatprep.mubr.bf16.mxu0 0
      %1058 = vmatmul.mubr.bf16.gmra.mrb[0].mxu0 %v789
      %v1059 = vpop.f32.mrb[0].mxu0
      %v1060 = vadd.f32 %v919, %v1059
      %v1061 = vpop.f32.mrb[0].mxu0
      %v1062 = vadd.f32 %v921, %v1061
      %v1063 = vpop.f32.mrb[0].mxu0
      %v1064 = vadd.f32 %v923, %v1063
      %v1065 = vpop.f32.mrb[0].mxu0
      %v1066 = vadd.f32 %v925, %v1065
      %1067 = vmatprep.mubr.bf16.mxu0 0
      %1068 = vmatmul.mubr.bf16.gmra.mrb[0].mxu0 %v792
      %v1069 = vpop.f32.mrb[0].mxu0
      %v1070 = vadd.f32 %v929, %v1069
      %v1071 = vpop.f32.mrb[0].mxu0
      %v1072 = vadd.f32 %v931, %v1071
      %v1073 = vpop.f32.mrb[0].mxu0
      %v1074 = vpop.f32.mrb[0].mxu0
      %1075 = vdwg.mxu0
      %1076 = vst [vmem:[%s177] sm:$0xff] %v970
      %vm1077 = vcmask 556032
      %1078 = vst.msk [vmem:[%s177 + $0x8] sm:$0xff] %vm1077, %v972
      %1079 = vst [vmem:[%s177 + $0x10] sm:$0xff] %v974
      %1080 = vst.msk [vmem:[%s177 + $0x18] sm:$0xff] %vm1077, %v976
      %1081 = vst [vmem:[%s177 + $0x20] sm:$0xff] %v980
      %1082 = vst.msk [vmem:[%s177 + $0x28] sm:$0xff] %vm1077, %v982
      %1083 = vst [vmem:[%s177 + $0x30] sm:$0xff] %v984
      %1084 = vst.msk [vmem:[%s177 + $0x38] sm:$0xff] %vm1077, %v986
      %1085 = vst [vmem:[%s177 + $0x40] sm:$0xff] %v990
      %1086 = vst.msk [vmem:[%s177 + $0x48] sm:$0xff] %vm1077, %v992
      %1087 = vst [vmem:[%s177 + $0x50] sm:$0xff] %v994
      %1088 = vst.msk [vmem:[%s177 + $0x58] sm:$0xff] %vm1077, %v996
      %1089 = vst [vmem:[%s177 + $0x60] sm:$0xff] %v1000
      %1090 = vst.msk [vmem:[%s177 + $0x68] sm:$0xff] %vm1077, %v1002
      %1091 = vst [vmem:[%s177 + $0x70] sm:$0xff] %v1004
      %1092 = vst.msk [vmem:[%s177 + $0x78] sm:$0xff] %vm1077, %v1006
      %1093 = vst [vmem:[%s177 + $0x80] sm:$0xff] %v1010
      %1094 = vst.msk [vmem:[%s177 + $0x88] sm:$0xff] %vm1077, %v1012
      %1095 = vst [vmem:[%s177 + $0x90] sm:$0xff] %v1014
      %1096 = vst.msk [vmem:[%s177 + $0x98] sm:$0xff] %vm1077, %v1016
      %1097 = vst [vmem:[%s177 + $0xa0] sm:$0xff] %v1020
      %1098 = vst.msk [vmem:[%s177 + $0xa8] sm:$0xff] %vm1077, %v1022
      %1099 = vst [vmem:[%s177 + $0xb0] sm:$0xff] %v1024
      %1100 = vst.msk [vmem:[%s177 + $0xb8] sm:$0xff] %vm1077, %v1026
      %1101 = vst [vmem:[%s177 + $0xc0] sm:$0xff] %v1030
      %1102 = vst.msk [vmem:[%s177 + $0xc8] sm:$0xff] %vm1077, %v1032
      %1103 = vst [vmem:[%s177 + $0xd0] sm:$0xff] %v1034
      %1104 = vst.msk [vmem:[%s177 + $0xd8] sm:$0xff] %vm1077, %v1036
      %1105 = vst [vmem:[%s177 + $0xe0] sm:$0xff] %v1040
      %1106 = vst.msk [vmem:[%s177 + $0xe8] sm:$0xff] %vm1077, %v1042
      %1107 = vst [vmem:[%s177 + $0xf0] sm:$0xff] %v1044
      %1108 = vst.msk [vmem:[%s177 + $0xf8] sm:$0xff] %vm1077, %v1046
      %1109 = vst [vmem:[%s177 + $0x100] sm:$0xff] %v1050
      %1110 = vst.msk [vmem:[%s177 + $0x108] sm:$0xff] %vm1077, %v1052
      %1111 = vst [vmem:[%s177 + $0x110] sm:$0xff] %v1054
      %1112 = vst.msk [vmem:[%s177 + $0x118] sm:$0xff] %vm1077, %v1056
      %1113 = vst [vmem:[%s177 + $0x120] sm:$0xff] %v1060
      %1114 = vst.msk [vmem:[%s177 + $0x128] sm:$0xff] %vm1077, %v1062
      %1115 = vst [vmem:[%s177 + $0x130] sm:$0xff] %v1064
      %1116 = vst.msk [vmem:[%s177 + $0x138] sm:$0xff] %vm1077, %v1066
      %1117 = vst [vmem:[%s177 + $0x140] sm:$0xff] %v1070
      %1118 = vst.msk [vmem:[%s177 + $0x148] sm:$0xff] %vm1077, %v1072
      %s1119 = smul.u32 21, %s14
      %p1120 = scmp.lt.s32.totalorder %s1119, 41
      %s1121 = scalar_select %p1120, %s1119, 41
      %s1122 = smul.addr %s1121, 2
      %s1123 = smul.addr %s1122, 8
      %s1124 = scalar_lea.vmem %s3, %s1123
      // Predicated region
      $region33: #{tpu_custom_call.1} parent=31 // pred_check
        %p1125 = pneg %p100
      $region34: #{tpu_custom_call.1} parent=31 // pred_check_branch
        %1127 = sbr.rel (%p1125) target = $region36
      $region35: #{tpu_custom_call.1} parent=31 // pred_region
        %s1128 = smul.u32 21, %s14
      $region36: #{tpu_custom_call.1} parent=31 // pred_fallthru
        _
    $region32: #{tpu_custom_call.1} parent=5 // pred_fallthru
      _
    %p1129 = scmp.le.s32.totalorder 2, %s9
    // Predicated region
    $region37: #{tpu_custom_call.1} parent=5 // pred_check
      %p1130 = pneg %p1129
    $region38: #{tpu_custom_call.1} parent=5 // pred_check_branch
      %1132 = sbr.rel (%p1130) target = $region40
    $region39: #{tpu_custom_call.1} parent=5 // pred_region
      %s1133 = ssub.s32 %s9, 2
      // Predicated region
      $region41: #{tpu_custom_call.1} parent=39 // pred_check
        %p1134 = pneg %p106
      $region42: #{tpu_custom_call.1} parent=39 // pred_check_branch
        %1136 = sbr.rel (%p1134) target = $region44
      $region43: #{tpu_custom_call.1} parent=39 // pred_region
        %s1137 = smul.u32 21, %s15
        %p1138 = scmp.lt.s32.totalorder %s1137, 41
        %s1139 = scalar_select %p1138, %s1137, 41
        %s1140 = smul.addr %s1139, 2
        %s1141 = smul.addr %s1140, 8
        %s1142 = scalar_lea.vmem %s3, %s1141
      $region44: #{tpu_custom_call.1} parent=39 // pred_fallthru
        _
    $region40: #{tpu_custom_call.1} parent=5 // pred_fallthru
      _
  $region6: #{tpu_custom_call.1} parent=0 // loop_footer
    %s13 = sadd.s32 1, %s9
  $region7: #{tpu_custom_call.1} parent=0 // loop_footer_branch
    %8 = sbr.rel target = $region3
  $region8: #{tpu_custom_call.1} parent=0 // loop_exit
    _

</llo_original>
